<compile_context>
chip_gen: v7x
topology: tpu7x:2x2x1
jax: 0.10.0
libtpu: 0.0.40
codegen_flags: <defaults>
</compile_context>

<pallas_src>
import math

import numpy as np
import jax
import jax.numpy as jnp
from jax.experimental import pallas as pl
from jax.experimental.pallas import tpu as pltpu

SQRT1_2 = np.float32(0.7071067811865476)
LN_EPS = np.float32(1e-12)
VMEM_LIMIT = 64 * 1024 * 1024


# ----------------------------------------------------------------------------- helpers


def _erf_f32(x):
    # Abramowitz & Stegun 7.1.26 rational approximation of erf, |err| < 1.5e-7 (f32 level).
    a1 = np.float32(0.254829592)
    a2 = np.float32(-0.284496736)
    a3 = np.float32(1.421413741)
    a4 = np.float32(-1.453152027)
    a5 = np.float32(1.061405429)
    p = np.float32(0.3275911)
    s = jnp.sign(x)
    ax = jnp.abs(x)
    t = pl.reciprocal(1.0 + p * ax, approx=True)  # EUP slot
    poly = ((((a5 * t + a4) * t + a3) * t + a2) * t + a1) * t
    return s * (1.0 - poly * jnp.exp(-ax * ax))


def _gelu_exact(x):
    # Matches torch GELU / HF 'gelu' (erf-based) to ~f32 precision.
    return 0.5 * x * (1.0 + _erf_f32(x * SQRT1_2))


def _layernorm_rows(h, g, b):
    mu = jnp.mean(h, axis=-1, keepdims=True)
    d = h - mu
    var = jnp.mean(d * d, axis=-1, keepdims=True)
    return d * jax.lax.rsqrt(var + LN_EPS) * g + b


def _maybe_cast(x, dtype):
    if dtype is not None and x.dtype != dtype:
        return x.astype(dtype)
    return x


def _tile(dim, max_tile, align):
    """Largest block size <= max_tile that divides `dim` and is `align`-aligned, else full dim."""
    # TODO(synk): non-divisor (cdiv + masked edge) N-tiling for enc_dim=1408-style configs is not
    # implemented; divisor tiling is exact for the test shapes used here.
    if dim <= max_tile:
        return dim
    t = (max_tile // align) * align
    while t >= align:
        if dim % t == 0:
            return t
        t -= align
    return dim


# ----------------------------------------------------------------------------- tiled linear (input projection)


def _make_linear_kernel(matmul_dtype):
    def kernel(x_ref, w_ref, b_ref, o_ref, acc_ref):
        @pl.when(pl.program_id(2) == 0)
        def _init():
            # accumulator starts at the broadcast bias -> no epilogue bias add
            acc_ref[...] = jnp.broadcast_to(b_ref[...].astype(jnp.float32), acc_ref.shape)

        x = _maybe_cast(x_ref[...], matmul_dtype)
        acc_ref[...] += jnp.dot(x, w_ref[...], preferred_element_type=jnp.float32)

        @pl.when(pl.program_id(2) == pl.num_programs(2) - 1)
        def _finalize():
            o_ref[...] = acc_ref[...].astype(o_ref.dtype)

    return kernel


def pallas_linear(x2d, w, b, *, matmul_dtype=None):
    """y = x2d @ w + b; x2d is (batch*seq, K) so batch rides the MXU M dimension."""
    m, k = x2d.shape
    k2, n = w.shape
    assert k == k2
    tm = _tile(m, 512, 8)
    tn = _tile(n, 1024, 128)
    tk = _tile(k, 1024, 128)
    grid = (m // tm, n // tn, k // tk)
    return pl.pallas_call(
        _make_linear_kernel(matmul_dtype),
        out_shape=jax.ShapeDtypeStruct((m, n), x2d.dtype),
        grid_spec=pltpu.PrefetchScalarGridSpec(
            num_scalar_prefetch=0,
            grid=grid,
            in_specs=[
                pl.BlockSpec((tm, tk), lambda i, j, kk: (i, kk)),
                pl.BlockSpec((tk, tn), lambda i, j, kk: (kk, j)),
                pl.BlockSpec((1, tn), lambda i, j, kk: (0, j)),
            ],
            out_specs=pl.BlockSpec((tm, tn), lambda i, j, kk: (i, j)),
            scratch_shapes=[pltpu.VMEM((tm, tn), jnp.float32)],
        ),
        compiler_params=pltpu.CompilerParams(
            dimension_semantics=("parallel", "parallel", "arbitrary"),
            vmem_limit_bytes=VMEM_LIMIT,
        ),
    )(x2d, w, b.reshape(1, n))


# ----------------------------------------------------------------------------- standalone LayerNorm (query tokens only; 1 launch / forward)


def _ln_kernel(x_ref, g_ref, b_ref, o_ref):
    h = x_ref[...].astype(jnp.float32)
    y = _layernorm_rows(h, g_ref[...].astype(jnp.float32), b_ref[...].astype(jnp.float32))
    o_ref[...] = y.astype(o_ref.dtype)


def pallas_layernorm(x2d, gamma, beta):
    m, n = x2d.shape
    tm = _tile(m, 512, 8)
    return pl.pallas_call(
        _ln_kernel,
        out_shape=jax.ShapeDtypeStruct((m, n), x2d.dtype),
        grid_spec=pltpu.PrefetchScalarGridSpec(
            num_scalar_prefetch=0,
            grid=(m // tm,),
            in_specs=[
                pl.BlockSpec((tm, n), lambda i: (i, 0)),
                pl.BlockSpec((1, n), lambda i: (0, 0)),
                pl.BlockSpec((1, n), lambda i: (0, 0)),
            ],
            out_specs=pl.BlockSpec((tm, n), lambda i: (i, 0)),
        ),
        compiler_params=pltpu.CompilerParams(
            dimension_semantics=("parallel",),
            vmem_limit_bytes=VMEM_LIMIT,
        ),
    )(x2d, gamma.reshape(1, n), beta.reshape(1, n))


# ----------------------------------------------------------------------------- fused self-attention block
# h_new = LayerNorm( softmax(q k^T / sqrt(dh)) v @ Wo + bo + h ),  q/k/v from one fused (D,3D) matmul


def _make_self_attn_kernel(num_heads, head_dim, hidden_dim, matmul_dtype):
    scale = np.float32(1.0 / math.sqrt(head_dim))
    D = hidden_dim

    def kernel(h_ref, wqkv_ref, bqkv_ref, wo_ref, bo_ref, g_ref, bt_ref, o_ref, ctx_ref):
        h = h_ref[0]                                       # (Q, D) f32
        x = _maybe_cast(h, matmul_dtype)
        qkv = jnp.dot(x, wqkv_ref[...], preferred_element_type=jnp.float32)
        qkv = qkv + bqkv_ref[...].astype(jnp.float32)      # (Q, 3D)
        qkv_m = _maybe_cast(qkv, matmul_dtype)
        for hd in range(num_heads):                        # static unroll; slices stay in VMEM
            lo = hd * head_dim
            qh = qkv_m[:, lo:lo + head_dim]
            kh = qkv_m[:, D + lo:D + lo + head_dim]
            vh = qkv_m[:, 2 * D + lo:2 * D + lo + head_dim]
            s = jax.lax.dot_general(qh, kh, (((1,), (1,)), ((), ())),
                                    preferred_element_type=jnp.float32) * scale
            s = s - jnp.max(s, axis=-1, keepdims=True)
            p = jnp.exp(s)
            p = p * pl.reciprocal(jnp.sum(p, axis=-1, keepdims=True), approx=True)
            p = _maybe_cast(p, matmul_dtype)
            ctx_ref[:, lo:lo + head_dim] = jnp.dot(p, vh, preferred_element_type=jnp.float32)
        ctx = _maybe_cast(ctx_ref[...], matmul_dtype)      # lane-dense (Q, D) context
        proj = jnp.dot(ctx, wo_ref[...], preferred_element_type=jnp.float32)
        hnew = proj + bo_ref[...].astype(jnp.float32) + h.astype(jnp.float32)
        y = _layernorm_rows(hnew, g_ref[...].astype(jnp.float32), bt_ref[...].astype(jnp.float32))
        o_ref[0] = y.astype(o_ref.dtype)                   # single full-width HBM store

    return kernel


def pallas_self_attention_block(hidden, wqkv, bqkv, wo, bo, gamma, beta, *,
                                num_heads, matmul_dtype=None):
    b, q, d = hidden.shape
    assert d % num_heads == 0
    head_dim = d // num_heads
    return pl.pallas_call(
        _make_self_attn_kernel(num_heads, head_dim, d, matmul_dtype),
        out_shape=jax.ShapeDtypeStruct((b, q, d), hidden.dtype),
        grid_spec=pltpu.PrefetchScalarGridSpec(
            num_scalar_prefetch=0,
            grid=(b,),
            in_specs=[
                pl.BlockSpec((1, q, d), lambda i: (i, 0, 0)),
                pl.BlockSpec((d, 3 * d), lambda i: (0, 0)),
                pl.BlockSpec((1, 3 * d), lambda i: (0, 0)),
                pl.BlockSpec((d, d), lambda i: (0, 0)),
                pl.BlockSpec((1, d), lambda i: (0, 0)),
                pl.BlockSpec((1, d), lambda i: (0, 0)),
                pl.BlockSpec((1, d), lambda i: (0, 0)),
            ],
            out_specs=pl.BlockSpec((1, q, d), lambda i: (i, 0, 0)),
            scratch_shapes=[pltpu.VMEM((q, d), jnp.float32)],
        ),
        compiler_params=pltpu.CompilerParams(
            dimension_semantics=("parallel",),
            vmem_limit_bytes=VMEM_LIMIT,
        ),
    )(hidden, wqkv, bqkv.reshape(1, -1), wo, bo.reshape(1, -1),
      gamma.reshape(1, -1), beta.reshape(1, -1))


# ----------------------------------------------------------------------------- fused cross-attention block
# K/V come from image_embeds through one fused (E, 2D) matmul


def _make_cross_attn_kernel(num_heads, head_dim, hidden_dim, matmul_dtype):
    scale = np.float32(1.0 / math.sqrt(head_dim))
    D = hidden_dim

    def kernel(h_ref, enc_ref, wq_ref, bq_ref, wkv_ref, bkv_ref, wo_ref, bo_ref,
               g_ref, bt_ref, o_ref, ctx_ref):
        h = h_ref[0]                                       # (Q, D)
        enc = enc_ref[0]                                   # (S, E)
        x = _maybe_cast(h, matmul_dtype)
        e = _maybe_cast(enc, matmul_dtype)
        qp = jnp.dot(x, wq_ref[...], preferred_element_type=jnp.float32)
        qp = qp + bq_ref[...].astype(jnp.float32)          # (Q, D)
        kv = jnp.dot(e, wkv_ref[...], preferred_element_type=jnp.float32)
        kv = kv + bkv_ref[...].astype(jnp.float32)         # (S, 2D)
        qp_m = _maybe_cast(qp, matmul_dtype)
        kv_m = _maybe_cast(kv, matmul_dtype)
        for hd in range(num_heads):
            lo = hd * head_dim
            qh = qp_m[:, lo:lo + head_dim]
            kh = kv_m[:, lo:lo + head_dim]
            vh = kv_m[:, D + lo:D + lo + head_dim]
            s = jax.lax.dot_general(qh, kh, (((1,), (1,)), ((), ())),
                                    preferred_element_type=jnp.float32) * scale
            s = s - jnp.max(s, axis=-1, keepdims=True)
            p = jnp.exp(s)
            p = p * pl.reciprocal(jnp.sum(p, axis=-1, keepdims=True), approx=True)
            p = _maybe_cast(p, matmul_dtype)
            ctx_ref[:, lo:lo + head_dim] = jnp.dot(p, vh, preferred_element_type=jnp.float32)
        ctx = _maybe_cast(ctx_ref[...], matmul_dtype)
        proj = jnp.dot(ctx, wo_ref[...], preferred_element_type=jnp.float32)
        hnew = proj + bo_ref[...].astype(jnp.float32) + h.astype(jnp.float32)
        y = _layernorm_rows(hnew, g_ref[...].astype(jnp.float32), bt_ref[...].astype(jnp.float32))
        o_ref[0] = y.astype(o_ref.dtype)

    return kernel


def pallas_cross_attention_block(hidden, enc, wq, bq, wkv, bkv, wo, bo, gamma, beta, *,
                                 num_heads, matmul_dtype=None):
    b, q, d = hidden.shape
    _, s, e = enc.shape
    head_dim = d // num_heads
    return pl.pallas_call(
        _make_cross_attn_kernel(num_heads, head_dim, d, matmul_dtype),
        out_shape=jax.ShapeDtypeStruct((b, q, d), hidden.dtype),
        grid_spec=pltpu.PrefetchScalarGridSpec(
            num_scalar_prefetch=0,
            grid=(b,),
            in_specs=[
                pl.BlockSpec((1, q, d), lambda i: (i, 0, 0)),
                pl.BlockSpec((1, s, e), lambda i: (i, 0, 0)),
                pl.BlockSpec((d, d), lambda i: (0, 0)),
                pl.BlockSpec((1, d), lambda i: (0, 0)),
                pl.BlockSpec((e, 2 * d), lambda i: (0, 0)),
                pl.BlockSpec((1, 2 * d), lambda i: (0, 0)),
                pl.BlockSpec((d, d), lambda i: (0, 0)),
                pl.BlockSpec((1, d), lambda i: (0, 0)),
                pl.BlockSpec((1, d), lambda i: (0, 0)),
                pl.BlockSpec((1, d), lambda i: (0, 0)),
            ],
            out_specs=pl.BlockSpec((1, q, d), lambda i: (i, 0, 0)),
            scratch_shapes=[pltpu.VMEM((q, d), jnp.float32)],
        ),
        compiler_params=pltpu.CompilerParams(
            dimension_semantics=("parallel",),
            vmem_limit_bytes=VMEM_LIMIT,
        ),
    )(hidden, enc, wq, bq.reshape(1, -1), wkv, bkv.reshape(1, -1), wo, bo.reshape(1, -1),
      gamma.reshape(1, -1), beta.reshape(1, -1))


# ----------------------------------------------------------------------------- fused FFN block (+ optional final projection)
# y = LayerNorm( gelu(x @ W1 + b1) @ W2 + b2 + x ); optionally y = y @ Wp + bp (last layer)


def _make_ffn_kernel(matmul_dtype, fuse_out_proj):
    def kernel(x_ref, w1_ref, b1_ref, w2_ref, b2_ref, g_ref, bt_ref, *rest):
        if fuse_out_proj:
            wp_ref, bp_ref, o_ref = rest
        else:
            (o_ref,) = rest
        x = x_ref[...]                                     # (tm, D) f32
        xm = _maybe_cast(x, matmul_dtype)
        inter = jnp.dot(xm, w1_ref[...], preferred_element_type=jnp.float32)
        inter = _gelu_exact(inter + b1_ref[...].astype(jnp.float32))
        inter_m = _maybe_cast(inter, matmul_dtype)
        hnew = (jnp.dot(inter_m, w2_ref[...], preferred_element_type=jnp.float32)
                + b2_ref[...].astype(jnp.float32) + x.astype(jnp.float32))
        y = _layernorm_rows(hnew, g_ref[...].astype(jnp.float32), bt_ref[...].astype(jnp.float32))
        if fuse_out_proj:
            ym = _maybe_cast(y, matmul_dtype)
            y = jnp.dot(ym, wp_ref[...], preferred_element_type=jnp.float32)
            y = y + bp_ref[...].astype(jnp.float32)
        o_ref[...] = y.astype(o_ref.dtype)

    return kernel


def pallas_ffn_block(x2d, w1, b1, w2, b2, gamma, beta, *, out_w=None, out_b=None,
                     matmul_dtype=None):
    m, d = x2d.shape
    inter_dim = w1.shape[1]
    fuse = out_w is not None
    n_out = out_w.shape[1] if fuse else d
    tm = _tile(m, 512, 8)
    in_specs = [
        pl.BlockSpec((tm, d), lambda i: (i, 0)),
        pl.BlockSpec((d, inter_dim), lambda i: (0, 0)),
        pl.BlockSpec((1, inter_dim), lambda i: (0, 0)),
        pl.BlockSpec((inter_dim, d), lambda i: (0, 0)),
        pl.BlockSpec((1, d), lambda i: (0, 0)),
        pl.BlockSpec((1, d), lambda i: (0, 0)),
        pl.BlockSpec((1, d), lambda i: (0, 0)),
    ]
    args = [x2d, w1, b1.reshape(1, -1), w2, b2.reshape(1, -1),
            gamma.reshape(1, -1), beta.reshape(1, -1)]
    if fuse:
        in_specs += [pl.BlockSpec((d, n_out), lambda i: (0, 0)),
                     pl.BlockSpec((1, n_out), lambda i: (0, 0))]
        args += [out_w, out_b.reshape(1, -1)]
    return pl.pallas_call(
        _make_ffn_kernel(matmul_dtype, fuse),
        out_shape=jax.ShapeDtypeStruct((m, n_out), x2d.dtype),
        grid_spec=pltpu.PrefetchScalarGridSpec(
            num_scalar_prefetch=0,
            grid=(m // tm,),
            in_specs=in_specs,
            out_specs=pl.BlockSpec((tm, n_out), lambda i: (i, 0)),
        ),
        compiler_params=pltpu.CompilerParams(
            dimension_semantics=("parallel",),
            vmem_limit_bytes=VMEM_LIMIT,
        ),
    )(*args)


# ----------------------------------------------------------------------------- host-side weight fusion / casting


def prepare_fused_params(params, matmul_dtype=None):
    """Concatenate QKV / KV weights once and (optionally) store matmul weights as bf16 in HBM."""
    wdt = jnp.float32 if matmul_dtype is None else matmul_dtype

    def cw(w):
        return w.astype(wdt)

    fp = {
        "in_proj_w": cw(params["in_proj_w"]), "in_proj_b": params["in_proj_b"],
        "emb_ln_g": params["emb_ln_g"], "emb_ln_b": params["emb_ln_b"],
        "out_proj_w": cw(params["out_proj_w"]), "out_proj_b": params["out_proj_b"],
        "layers": [],
    }
    for lp in params["layers"]:
        f = {
            "sa_wqkv": cw(jnp.concatenate([lp["sa_q_w"], lp["sa_k_w"], lp["sa_v_w"]], axis=1)),
            "sa_bqkv": jnp.concatenate([lp["sa_q_b"], lp["sa_k_b"], lp["sa_v_b"]]),
            "sa_wo": cw(lp["sa_o_w"]), "sa_bo": lp["sa_o_b"],
            "sa_ln_g": lp["sa_ln_g"], "sa_ln_b": lp["sa_ln_b"],
            "ffn_w1": cw(lp["ffn_w1"]), "ffn_b1": lp["ffn_b1"],
            "ffn_w2": cw(lp["ffn_w2"]), "ffn_b2": lp["ffn_b2"],
            "ffn_ln_g": lp["ffn_ln_g"], "ffn_ln_b": lp["ffn_ln_b"],
        }
        if "ca_q_w" in lp:
            f["ca_wq"] = cw(lp["ca_q_w"])
            f["ca_bq"] = lp["ca_q_b"]
            f["ca_wkv"] = cw(jnp.concatenate([lp["ca_k_w"], lp["ca_v_w"]], axis=1))
            f["ca_bkv"] = jnp.concatenate([lp["ca_k_b"], lp["ca_v_b"]])
            f["ca_wo"] = cw(lp["ca_o_w"])
            f["ca_bo"] = lp["ca_o_b"]
            f["ca_ln_g"] = lp["ca_ln_g"]
            f["ca_ln_b"] = lp["ca_ln_b"]
        fp["layers"].append(f)
    return fp


# ----------------------------------------------------------------------------- full forward


def qformer_projector_forward(img_patches, params, *, num_heads,
                              cross_attention_frequency=2, matmul_dtype=None):
    B, s_img, _ = img_patches.shape
    fp = prepare_fused_params(params, matmul_dtype)

    # qformer_input_proj: mm_hidden_size -> encoder_hidden_size (the one genuinely large matmul)
    enc2d = pallas_linear(img_patches.reshape(B * s_img, -1),
                          fp["in_proj_w"], fp["in_proj_b"], matmul_dtype=matmul_dtype)
    enc = enc2d.reshape(B, s_img, -1)

    # query tokens + embedding LayerNorm (hidden_dropout_prob = 0 -> identity); 1 launch total
    qt = params["query_tokens"]                      # (1, Q, D)
    q_num, d = qt.shape[1], qt.shape[2]
    h0 = pallas_layernorm(qt.reshape(q_num, d), fp["emb_ln_g"], fp["emb_ln_b"])
    hidden = jnp.broadcast_to(h0.reshape(1, q_num, d), (B, q_num, d))

    n_layers = len(fp["layers"])
    for li, lp in enumerate(fp["layers"]):
        # ---- fused self-attention block ----
        hidden = pallas_self_attention_block(
            hidden, lp["sa_wqkv"], lp["sa_bqkv"], lp["sa_wo"], lp["sa_bo"],
            lp["sa_ln_g"], lp["sa_ln_b"], num_heads=num_heads, matmul_dtype=matmul_dtype)

        # ---- fused cross-attention block (every `cross_attention_frequency` layers) ----
        if li % cross_attention_frequency == 0:
            hidden = pallas_cross_attention_block(
                hidden, enc, lp["ca_wq"], lp["ca_bq"], lp["ca_wkv"], lp["ca_bkv"],
                lp["ca_wo"], lp["ca_bo"], lp["ca_ln_g"], lp["ca_ln_b"],
                num_heads=num_heads, matmul_dtype=matmul_dtype)

        # ---- fused FFN block (Linear -> GELU -> Linear + residual + LN); last layer also
        # applies the final hidden->hidden output projection in its epilogue ----
        is_last = li == n_layers - 1
        out2d = pallas_ffn_block(
            hidden.reshape(B * q_num, d), lp["ffn_w1"], lp["ffn_b1"], lp["ffn_w2"], lp["ffn_b2"],
            lp["ffn_ln_g"], lp["ffn_ln_b"],
            out_w=fp["out_proj_w"] if is_last else None,
            out_b=fp["out_proj_b"] if is_last else None,
            matmul_dtype=matmul_dtype)
        hidden = out2d.reshape(B, q_num, -1)

    return hidden


# ----------------------------------------------------------------------------- parameters & reference

# TODO(synk): pretrained BLIP-2 weights / HF post_init initialization are not reproduced;
# deterministic synthetic parameters are used. Weights are stored (in_features, out_features),
# i.e. x @ W + b, equivalent to PyTorch's x @ W.T + b.
def make_qformer_params(key, *, mm_dim, enc_dim, llm_dim, num_query_tokens,
                        num_layers, cross_attention_frequency=2):
    inter_dim = 4 * llm_dim
    keys = iter(jax.random.split(key, 8 + 32 * num_layers))

    def linear(din, dout):
        w = jax.random.normal(next(keys), (din, dout), jnp.float32) * np.float32(1.0 / math.sqrt(din))
        b = jax.random.normal(next(keys), (dout,), jnp.float32) * np.float32(0.01)
        return w, b

    def layernorm(dim):
        g = 1.0 + 0.01 * jax.random.normal(next(keys), (dim,), jnp.float32)
        b = 0.01 * jax.random.normal(next(keys), (dim,), jnp.float32)
        return g, b

    params = {}
    params["in_proj_w"], params["in_proj_b"] = linear(mm_dim, enc_dim)
    params["query_tokens"] = 0.02 * jax.random.normal(
        next(keys), (1, num_query_tokens, llm_dim), jnp.float32)
    params["emb_ln_g"], params["emb_ln_b"] = layernorm(llm_dim)
    layers = []
    for li in range(num_layers):
        lp = {}
        lp["sa_q_w"], lp["sa_q_b"] = linear(llm_dim, llm_dim)
        lp["sa_k_w"], lp["sa_k_b"] = linear(llm_dim, llm_dim)
        lp["sa_v_w"], lp["sa_v_b"] = linear(llm_dim, llm_dim)
        lp["sa_o_w"], lp["sa_o_b"] = linear(llm_dim, llm_dim)
        lp["sa_ln_g"], lp["sa_ln_b"] = layernorm(llm_dim)
        if li % cross_attention_frequency == 0:
            lp["ca_q_w"], lp["ca_q_b"] = linear(llm_dim, llm_dim)
            lp["ca_k_w"], lp["ca_k_b"] = linear(enc_dim, llm_dim)
            lp["ca_v_w"], lp["ca_v_b"] = linear(enc_dim, llm_dim)
            lp["ca_o_w"], lp["ca_o_b"] = linear(llm_dim, llm_dim)
            lp["ca_ln_g"], lp["ca_ln_b"] = layernorm(llm_dim)
        lp["ffn_w1"], lp["ffn_b1"] = linear(llm_dim, inter_dim)
        lp["ffn_w2"], lp["ffn_b2"] = linear(inter_dim, llm_dim)
        lp["ffn_ln_g"], lp["ffn_ln_b"] = layernorm(llm_dim)
        layers.append(lp)
    params["layers"] = layers
    params["out_proj_w"], params["out_proj_b"] = linear(llm_dim, llm_dim)
    return params


def _reference_forward(img_patches, params, *, num_heads, cross_attention_frequency=2):
    # Plain-JAX reference mirroring the PyTorch forward (exact erf, HIGHEST-precision dots).
    prec = jax.lax.Precision.HIGHEST

    def linear(x, w, b):
        return jnp.dot(x, w, precision=prec) + b

    def gelu(x):
        return 0.5 * x * (1.0 + jax.scipy.special.erf(x * SQRT1_2))

    def ln(x, g, b):
        mu = x.mean(-1, keepdims=True)
        var = ((x - mu) ** 2).mean(-1, keepdims=True)
        return (x - mu) / jnp.sqrt(var + 1e-12) * g + b

    def mha(q, k, v):
        bsz, lq, dim = q.shape
        lk = k.shape[1]
        dh = dim // num_heads
        qh = q.reshape(bsz, lq, num_heads, dh).transpose(0, 2, 1, 3)
        kh = k.reshape(bsz, lk, num_heads, dh).transpose(0, 2, 1, 3)
        vh = v.reshape(bsz, lk, num_heads, dh).transpose(0, 2, 1, 3)
        s = jnp.einsum("bhqd,bhkd->bhqk", qh, kh, precision=prec) / math.sqrt(dh)
        p = jax.nn.softmax(s, axis=-1)
        o = jnp.einsum("bhqk,bhkd->bhqd", p, vh, precision=prec)
        return o.transpose(0, 2, 1, 3).reshape(bsz, lq, dim)

    B = img_patches.shape[0]
    enc = linear(img_patches, params["in_proj_w"], params["in_proj_b"])
    qt = params["query_tokens"]
    hidden = jnp.broadcast_to(ln(qt, params["emb_ln_g"], params["emb_ln_b"]),
                              (B, qt.shape[1], qt.shape[2]))
    for li, lp in enumerate(params["layers"]):
        q = linear(hidden, lp["sa_q_w"], lp["sa_q_b"])
        k = linear(hidden, lp["sa_k_w"], lp["sa_k_b"])
        v = linear(hidden, lp["sa_v_w"], lp["sa_v_b"])
        ctx = mha(q, k, v)
        hidden = ln(linear(ctx, lp["sa_o_w"], lp["sa_o_b"]) + hidden,
                    lp["sa_ln_g"], lp["sa_ln_b"])
        if li % cross_attention_frequency == 0:
            q = linear(hidden, lp["ca_q_w"], lp["ca_q_b"])
            k = linear(enc, lp["ca_k_w"], lp["ca_k_b"])
            v = linear(enc, lp["ca_v_w"], lp["ca_v_b"])
            ctx = mha(q, k, v)
            hidden = ln(linear(ctx, lp["ca_o_w"], lp["ca_o_b"]) + hidden,
                        lp["ca_ln_g"], lp["ca_ln_b"])
        inter = gelu(linear(hidden, lp["ffn_w1"], lp["ffn_b1"]))
        hidden = ln(linear(inter, lp["ffn_w2"], lp["ffn_b2"]) + hidden,
                    lp["ffn_ln_g"], lp["ffn_ln_b"])
    return linear(hidden, params["out_proj_w"], params["out_proj_b"])


# ----------------------------------------------------------------------------- test


if __name__ == "__main__":
    # Scaled-down but structurally faithful config:
    #   vision_dim (mm_hidden_size) = 128, encoder_hidden_size = 128 (1408 in the real config),
    #   llm_dim (hidden_size) = 128, num_attention_heads = 4 (64 in the real config),
    #   intermediate_size = 4 * hidden, num_query_tokens = 16, num_qformer_layers = 2
    #   (layer 0 has cross-attention, layer 1 does not), 64 image patches, batch = 2.
    B, S_IMG, MM_DIM, ENC_DIM, LLM_DIM = 2, 64, 128, 128, 128
    NUM_HEADS, NUM_QUERY, NUM_LAYERS, XATTN_FREQ = 4, 16, 2, 2

    key = jax.random.PRNGKey(0)
    kp, kx = jax.random.split(key)
    params = make_qformer_params(kp, mm_dim=MM_DIM, enc_dim=ENC_DIM, llm_dim=LLM_DIM,
                                 num_query_tokens=NUM_QUERY, num_layers=NUM_LAYERS,
                                 cross_attention_frequency=XATTN_FREQ)
    img_patches = jax.random.normal(kx, (B, S_IMG, MM_DIM), dtype=jnp.float32)

    out = qformer_projector_forward(img_patches, params, num_heads=NUM_HEADS,
                                    cross_attention_frequency=XATTN_FREQ)
    out = jax.block_until_ready(out)
    assert out.shape == (B, NUM_QUERY, LLM_DIM) and out.dtype == jnp.float32

    ref = jax.block_until_ready(
        _reference_forward(img_patches, params, num_heads=NUM_HEADS,
                           cross_attention_frequency=XATTN_FREQ))
    np.testing.assert_allclose(np.asarray(out), np.asarray(ref), rtol=2e-2, atol=2e-2)

    # bf16 weight streaming + f32 accumulation (v6e/v7x MXU fast path); checked against the
    # f32 reference at a looser tolerance so regressions aren't silent.
    out_bf16 = jax.block_until_ready(
        qformer_projector_forward(img_patches, params, num_heads=NUM_HEADS,
                                  cross_attention_frequency=XATTN_FREQ,
                                  matmul_dtype=jnp.bfloat16))
    assert out_bf16.shape == out.shape and bool(jnp.isfinite(out_bf16).all())
    np.testing.assert_allclose(np.asarray(out_bf16), np.asarray(ref), rtol=1e-1, atol=1e-1)

    print("KERNEL_OK")
</pallas_src>

<mosaic_0001>
module attributes {stable_mosaic.version = 11 : i64} {
  func.func @kernel(%arg0: i32, %arg1: i32, %arg2: i32, %arg3: memref<128x128xf32, #tpu.memory_space<vmem>>, %arg4: memref<128x128xf32, #tpu.memory_space<vmem>>, %arg5: memref<1x128xf32, #tpu.memory_space<vmem>>, %arg6: memref<128x128xf32, #tpu.memory_space<vmem>>, %arg7: memref<128x128xf32, #tpu.memory_space<vmem>>) attributes {dimension_semantics = [#tpu.dimension_semantics<parallel>, #tpu.dimension_semantics<parallel>, #tpu.dimension_semantics<arbitrary>], iteration_bounds = array<i64: 1, 1, 1>, scalar_prefetch = 0 : i64, scratch_operands = 1 : i64, tpu.core_type = #tpu.core_type<tc>, window_params = [{transform_indices = @transform_0, window_bounds = array<i64: 128, 128>}, {transform_indices = @transform_1, window_bounds = array<i64: 128, 128>}, {transform_indices = @transform_2, window_bounds = array<i64: 1, 128>}, {transform_indices = @transform_3, window_bounds = array<i64: 128, 128>}]} {
    %c0_i32 = arith.constant 0 : i32
    %0 = arith.cmpi eq, %arg2, %c0_i32 : i32
    %1 = arith.extui %0 : i1 to i32
    %c0_i32_0 = arith.constant 0 : i32
    %2 = arith.cmpi ne, %1, %c0_i32_0 : i32
    scf.if %2 {
      %c0_10 = arith.constant 0 : index
      %c0_11 = arith.constant 0 : index
      %12 = vector.load %arg5[%c0_10, %c0_11] : memref<1x128xf32, #tpu.memory_space<vmem>>, vector<1x128xf32>
      %13 = vector.shape_cast %12 : vector<1x128xf32> to vector<1x128xf32>
      %14 = vector.broadcast %13 : vector<1x128xf32> to vector<128x128xf32>
      %c0_12 = arith.constant 0 : index
      %c0_13 = arith.constant 0 : index
      %15 = vector.load %arg7[%c0_12, %c0_13] : memref<128x128xf32, #tpu.memory_space<vmem>>, vector<128x128xf32>
      tpu.vector_store %arg7[%c0_12, %c0_13], %14 {strides = array<i32>} : memref<128x128xf32, #tpu.memory_space<vmem>>, vector<128x128xf32>,
    } else {
    }
    %c0 = arith.constant 0 : index
    %c0_1 = arith.constant 0 : index
    %3 = vector.load %arg3[%c0, %c0_1] : memref<128x128xf32, #tpu.memory_space<vmem>>, vector<128x128xf32>
    %c0_2 = arith.constant 0 : index
    %c0_3 = arith.constant 0 : index
    %4 = vector.load %arg7[%c0_2, %c0_3] : memref<128x128xf32, #tpu.memory_space<vmem>>, vector<128x128xf32>
    %c0_4 = arith.constant 0 : index
    %c0_5 = arith.constant 0 : index
    %5 = vector.load %arg4[%c0_4, %c0_5] : memref<128x128xf32, #tpu.memory_space<vmem>>, vector<128x128xf32>
    %cst = arith.constant dense<0.000000e+00> : vector<128x128xf32>
    %6 = tpu.matmul %3, %5, %cst {dimension_numbers = #tpu.dot_dimension_numbers<[1], [0], [0], [1], [0, 0, 1, 1], [], []>} : vector<128x128xf32>, vector<128x128xf32>, vector<128x128xf32> -> vector<128x128xf32>
    %7 = arith.addf %4, %6 : vector<128x128xf32>
    %c0_6 = arith.constant 0 : index
    %c0_7 = arith.constant 0 : index
    %8 = vector.load %arg7[%c0_6, %c0_7] : memref<128x128xf32, #tpu.memory_space<vmem>>, vector<128x128xf32>
    tpu.vector_store %arg7[%c0_6, %c0_7], %7 {strides = array<i32>} : memref<128x128xf32, #tpu.memory_space<vmem>>, vector<128x128xf32>,
    %c0_i32_8 = arith.constant 0 : i32
    %9 = arith.cmpi eq, %arg2, %c0_i32_8 : i32
    %10 = arith.extui %9 : i1 to i32
    %c0_i32_9 = arith.constant 0 : i32
    %11 = arith.cmpi ne, %10, %c0_i32_9 : i32
    scf.if %11 {
      %c0_10 = arith.constant 0 : index
      %c0_11 = arith.constant 0 : index
      %12 = vector.load %arg7[%c0_10, %c0_11] : memref<128x128xf32, #tpu.memory_space<vmem>>, vector<128x128xf32>
      %c0_12 = arith.constant 0 : index
      %c0_13 = arith.constant 0 : index
      %13 = vector.load %arg6[%c0_12, %c0_13] : memref<128x128xf32, #tpu.memory_space<vmem>>, vector<128x128xf32>
      tpu.vector_store %arg6[%c0_12, %c0_13], %12 {strides = array<i32>} : memref<128x128xf32, #tpu.memory_space<vmem>>, vector<128x128xf32>,
    } else {
    }
    return
  }
  func.func @transform_0(%arg0: i32, %arg1: i32, %arg2: i32) -> (i32, i32) {
    %c0_i32 = arith.constant 0 : i32
    return %arg0, %arg2 : i32, i32
  }
  func.func @transform_1(%arg0: i32, %arg1: i32, %arg2: i32) -> (i32, i32) {
    %c0_i32 = arith.constant 0 : i32
    return %arg2, %arg1 : i32, i32
  }
  func.func @transform_2(%arg0: i32, %arg1: i32, %arg2: i32) -> (i32, i32) {
    %c0_i32 = arith.constant 0 : i32
    %c0_i32_0 = arith.constant 0 : i32
    return %c0_i32, %arg1 : i32, i32
  }
  func.func @transform_3(%arg0: i32, %arg1: i32, %arg2: i32) -> (i32, i32) {
    %c0_i32 = arith.constant 0 : i32
    return %arg0, %arg1 : i32, i32
  }
}

</mosaic_0001>

<llo_original>
// kernel: tpu_custom_call.1
$region0: #{tpu_custom_call.1}
  #allocation0 [shape = 'u32[]', space=smem, size = 0x4, offset = 0x4, fixed_abs, tag = 'smem constant byte address 0x4 - core index']
  #allocation1 [shape = 'u32[144,128]{1,0:T(1,128)}', space=vmem, size = 0x12000, scoped, tag = 'internal scratch']
  #allocation2 [shape = 'f32[128,128]{1,0:T(8,128)}', space=vmem, size = 0x10000, scoped, tag = 'scratch operand']
  %s0 = inlined_call_operand.hbm [shape: f32[128,128], index: 0, kind: input, shape index: {}]
  %s1 = inlined_call_operand.hbm [shape: f32[128,128], index: 1, kind: input, shape index: {}]
  %s2 = inlined_call_operand.hbm [shape: f32[1,128], index: 2, kind: input, shape index: {}]
  %s3 = inlined_call_operand.hbm [shape: f32[128,128], index: 3, kind: output, shape index: {}]
  %s4 = sld [smem:[#allocation0]]
  $region42: #{tpu_custom_call.1} parent=0
    _
  %s6 = ssub.s32 1, %s4
  %s7 = scalar_select 0, %s6, %s4
  $region1: #{tpu_custom_call.1} parent=0
    #allocation3 [shape = 'u8[65536]{0}', space=vmem, size = 0x10000, scoped, tag = 'input window, operand 0, single buffered']
    #allocation4 [shape = 's32[1]{0}', space=sflag, size = 0x4, scoped, tag = 'scoped memory for tpu_custom_call.1']
    #allocation5 [shape = 's32[1]{0}', space=sflag, size = 0x4, scoped, tag = 'scoped memory for tpu_custom_call.1']
    #allocation6 [shape = 'u8[65536]{0}', space=vmem, size = 0x10000, scoped, tag = 'input window, operand 1, single buffered']
    #allocation7 [shape = 's32[1]{0}', space=sflag, size = 0x4, scoped, tag = 'scoped memory for tpu_custom_call.1']
    #allocation8 [shape = 'u8[512]{0}', space=vmem, size = 0x400, scoped, tag = 'input window, operand 2, single buffered']
    #allocation9 [shape = 'u8[65536]{0}', space=vmem, size = 0x10000, scoped, tag = 'output window, operand 0, single buffered']
    %8 = vsyncpa [#allocation4], 0
    %9 = vsyncpa [#allocation7], 0
    %10 = vsyncpa [#allocation5], 0
    // Predicated region
    $region2: #{tpu_custom_call.1} parent=1 // pred_check
      _
    $region3: #{tpu_custom_call.1} parent=1 // pred_check_branch
      %12 = sbr.rel (0) target = $region5
    $region4: #{tpu_custom_call.1} parent=1 // pred_region
      %s14 = ssub.s32 2048, 2048
      %15 = vsyncadd [#allocation4], %s14
      %s16 = sshll.u32 [#allocation3], 4
      %s17 = int_to_ptr.vmem [resolvable:$true] %s16
      %22 = dma.hbm_to_vmem [thread:$0]  %s0, 2048, %s17, [#allocation4], 128, 128, 8
    $region5: #{tpu_custom_call.1} parent=1 // pred_fallthru
      _
    // Predicated region
    $region6: #{tpu_custom_call.1} parent=1 // pred_check
      _
    $region7: #{tpu_custom_call.1} parent=1 // pred_check_branch
      %24 = sbr.rel (0) target = $region9
    $region8: #{tpu_custom_call.1} parent=1 // pred_region
      %s26 = ssub.s32 2048, 2048
      %27 = vsyncadd [#allocation7], %s26
      %s28 = sshll.u32 [#allocation6], 4
      %s29 = int_to_ptr.vmem [resolvable:$true] %s28
      %34 = dma.hbm_to_vmem [thread:$0]  %s1, 2048, %s29, [#allocation7], 128, 128, 8
    $region9: #{tpu_custom_call.1} parent=1 // pred_fallthru
      _
    // Predicated region
    $region10: #{tpu_custom_call.1} parent=1 // pred_check
      _
    $region11: #{tpu_custom_call.1} parent=1 // pred_check_branch
      %36 = sbr.rel (0) target = $region13
    $region12: #{tpu_custom_call.1} parent=1 // pred_region
      %s38 = ssub.s32 16, 16
      %39 = vsyncadd [#allocation7], %s38
      %s41 = sshll.u32 [#allocation8], 4
      %s42 = int_to_ptr.vmem [resolvable:$true] %s41
      %44 = dma.hbm_to_vmem [thread:$0]  %s2, 16, %s42, [#allocation7]
    $region13: #{tpu_custom_call.1} parent=1 // pred_fallthru
      _
    // Predicated region
    $region14: #{tpu_custom_call.1} parent=1 // pred_check
      _
    $region15: #{tpu_custom_call.1} parent=1 // pred_check_branch
      %46 = sbr.rel (0) target = $region17
    $region16: #{tpu_custom_call.1} parent=1 // pred_region
      %47 = dma.done [#allocation4], 2048
    $region17: #{tpu_custom_call.1} parent=1 // pred_fallthru
      _
    // Predicated region
    $region18: #{tpu_custom_call.1} parent=1 // pred_check
      _
    $region19: #{tpu_custom_call.1} parent=1 // pred_check_branch
      %49 = sbr.rel (0) target = $region21
    $region20: #{tpu_custom_call.1} parent=1 // pred_region
      %50 = dma.done [#allocation7], 2048
    $region21: #{tpu_custom_call.1} parent=1 // pred_fallthru
      _
    // Predicated region
    $region22: #{tpu_custom_call.1} parent=1 // pred_check
      _
    $region23: #{tpu_custom_call.1} parent=1 // pred_check_branch
      %52 = sbr.rel (0) target = $region25
    $region24: #{tpu_custom_call.1} parent=1 // pred_region
      %53 = dma.done [#allocation7], 16
    $region25: #{tpu_custom_call.1} parent=1 // pred_fallthru
      _
    %p54 = scmp.eq.s32.totalorder 0, 0
    // Predicated region
    $region26: #{tpu_custom_call.1} parent=1 // pred_check
      %p55 = pneg %p54
    $region27: #{tpu_custom_call.1} parent=1 // pred_check_branch
      %57 = sbr.rel (%p55) target = $region29
    $region28: #{tpu_custom_call.1} parent=1 // pred_region
      %v58 = vld [vmem:[#allocation8] sm:$0x1]
      %v60 = vlaneseq
      %v61 = vshrl.u32 %v60, 7
      %v62 = vsub.s32 0, %v61
      %v63 = vrot.slane %v58, %v62
      %65 = vst [vmem:[#allocation2] sm:$0xff] %v63
      %66 = vst [vmem:[#allocation2 + $0x8] sm:$0xff] %v63
      %67 = vst [vmem:[#allocation2 + $0x10] sm:$0xff] %v63
      %68 = vst [vmem:[#allocation2 + $0x18] sm:$0xff] %v63
      %69 = vst [vmem:[#allocation2 + $0x20] sm:$0xff] %v63
      %70 = vst [vmem:[#allocation2 + $0x28] sm:$0xff] %v63
      %71 = vst [vmem:[#allocation2 + $0x30] sm:$0xff] %v63
      %72 = vst [vmem:[#allocation2 + $0x38] sm:$0xff] %v63
      %73 = vst [vmem:[#allocation2 + $0x40] sm:$0xff] %v63
      %74 = vst [vmem:[#allocation2 + $0x48] sm:$0xff] %v63
      %75 = vst [vmem:[#allocation2 + $0x50] sm:$0xff] %v63
      %76 = vst [vmem:[#allocation2 + $0x58] sm:$0xff] %v63
      %77 = vst [vmem:[#allocation2 + $0x60] sm:$0xff] %v63
      %78 = vst [vmem:[#allocation2 + $0x68] sm:$0xff] %v63
      %79 = vst [vmem:[#allocation2 + $0x70] sm:$0xff] %v63
      %80 = vst [vmem:[#allocation2 + $0x78] sm:$0xff] %v63
    $region29: #{tpu_custom_call.1} parent=1 // pred_fallthru
      _
    %v81 = vld [vmem:[#allocation3] sm:$0xff]
    %v82 = vld [vmem:[#allocation3 + $0x8] sm:$0xff]
    %v83 = vld [vmem:[#allocation3 + $0x10] sm:$0xff]
    %v84 = vld [vmem:[#allocation3 + $0x18] sm:$0xff]
    %v85 = vld [vmem:[#allocation3 + $0x20] sm:$0xff]
    %v86 = vld [vmem:[#allocation3 + $0x28] sm:$0xff]
    %v87 = vld [vmem:[#allocation3 + $0x30] sm:$0xff]
    %v88 = vld [vmem:[#allocation3 + $0x38] sm:$0xff]
    %v89 = vld [vmem:[#allocation3 + $0x40] sm:$0xff]
    %v90 = vld [vmem:[#allocation3 + $0x48] sm:$0xff]
    %v91 = vld [vmem:[#allocation3 + $0x50] sm:$0xff]
    %v92 = vld [vmem:[#allocation3 + $0x58] sm:$0xff]
    %v93 = vld [vmem:[#allocation3 + $0x60] sm:$0xff]
    %v94 = vld [vmem:[#allocation3 + $0x68] sm:$0xff]
    %v95 = vld [vmem:[#allocation3 + $0x70] sm:$0xff]
    %v96 = vld [vmem:[#allocation3 + $0x78] sm:$0xff]
    %v97 = vld [vmem:[#allocation2] sm:$0xff]
    %v98 = vld [vmem:[#allocation2 + $0x8] sm:$0xff]
    %v99 = vld [vmem:[#allocation2 + $0x10] sm:$0xff]
    %v100 = vld [vmem:[#allocation2 + $0x18] sm:$0xff]
    %v101 = vld [vmem:[#allocation2 + $0x20] sm:$0xff]
    %v102 = vld [vmem:[#allocation2 + $0x28] sm:$0xff]
    %v103 = vld [vmem:[#allocation2 + $0x30] sm:$0xff]
    %v104 = vld [vmem:[#allocation2 + $0x38] sm:$0xff]
    %v105 = vld [vmem:[#allocation2 + $0x40] sm:$0xff]
    %v106 = vld [vmem:[#allocation2 + $0x48] sm:$0xff]
    %v107 = vld [vmem:[#allocation2 + $0x50] sm:$0xff]
    %v108 = vld [vmem:[#allocation2 + $0x58] sm:$0xff]
    %v109 = vld [vmem:[#allocation2 + $0x60] sm:$0xff]
    %v110 = vld [vmem:[#allocation2 + $0x68] sm:$0xff]
    %v111 = vld [vmem:[#allocation2 + $0x70] sm:$0xff]
    %v112 = vld [vmem:[#allocation2 + $0x78] sm:$0xff]
    %v113 = vld [vmem:[#allocation6] sm:$0xff]
    %v114 = vld [vmem:[#allocation6 + $0x8] sm:$0xff]
    %v115 = vld [vmem:[#allocation6 + $0x10] sm:$0xff]
    %v116 = vld [vmem:[#allocation6 + $0x18] sm:$0xff]
    %v117 = vld [vmem:[#allocation6 + $0x20] sm:$0xff]
    %v118 = vld [vmem:[#allocation6 + $0x28] sm:$0xff]
    %v119 = vld [vmem:[#allocation6 + $0x30] sm:$0xff]
    %v120 = vld [vmem:[#allocation6 + $0x38] sm:$0xff]
    %v121 = vld [vmem:[#allocation6 + $0x40] sm:$0xff]
    %v122 = vld [vmem:[#allocation6 + $0x48] sm:$0xff]
    %v123 = vld [vmem:[#allocation6 + $0x50] sm:$0xff]
    %v124 = vld [vmem:[#allocation6 + $0x58] sm:$0xff]
    %v125 = vld [vmem:[#allocation6 + $0x60] sm:$0xff]
    %v126 = vld [vmem:[#allocation6 + $0x68] sm:$0xff]
    %v127 = vld [vmem:[#allocation6 + $0x70] sm:$0xff]
    %v128 = vld [vmem:[#allocation6 + $0x78] sm:$0xff]
    %129 = vmatprep.subr.mxu0 0.0
    %130 = vmatpush1.msra.mxu0 %v113
    %131 = vmatprep.subr.mxu0 0.0
    %132 = vmatpush1.msra.mxu0 %v114
    %133 = vmatprep.subr.mxu0 0.0
    %134 = vmatpush1.msra.mxu0 %v115
    %135 = vmatprep.subr.mxu0 0.0
    %136 = vmatpush1.msra.mxu0 %v116
    %137 = vmatprep.subr.mxu0 0.0
    %138 = vmatpush1.msra.mxu0 %v117
    %139 = vmatprep.subr.mxu0 0.0
    %140 = vmatpush1.msra.mxu0 %v118
    %141 = vmatprep.subr.mxu0 0.0
    %142 = vmatpush1.msra.mxu0 %v119
    %143 = vmatprep.subr.mxu0 0.0
    %144 = vmatpush1.msra.mxu0 %v120
    %145 = vmatprep.subr.mxu0 0.0
    %146 = vmatpush1.msra.mxu0 %v121
    %147 = vmatprep.subr.mxu0 0.0
    %148 = vmatpush1.msra.mxu0 %v122
    %149 = vmatprep.subr.mxu0 0.0
    %150 = vmatpush1.msra.mxu0 %v123
    %151 = vmatprep.subr.mxu0 0.0
    %152 = vmatpush1.msra.mxu0 %v124
    %153 = vmatprep.subr.mxu0 0.0
    %154 = vmatpush1.msra.mxu0 %v125
    %155 = vmatprep.subr.mxu0 0.0
    %156 = vmatpush1.msra.mxu0 %v126
    %157 = vmatprep.subr.mxu0 0.0
    %158 = vmatpush1.msra.mxu0 %v127
    %159 = vmatprep.subr.mxu0 0.0
    %160 = vmatpush1.msra.mxu0 %v128
    %161 = vmatprep.subr.mxu0 0.0
    %162 = vmatpush1.msra.mxu0 0.0
    %163 = vmatprep.subr.mxu0 0.0
    %164 = vmatpush1.msra.mxu0 0.0
    %165 = vmatprep.subr.mxu0 0.0
    %166 = vmatpush1.msra.mxu0 0.0
    %167 = vmatprep.subr.mxu0 0.0
    %168 = vmatpush1.msra.mxu0 0.0
    %169 = vmatprep.subr.mxu0 0.0
    %170 = vmatpush1.msra.mxu0 0.0
    %171 = vmatprep.subr.mxu0 0.0
    %172 = vmatpush1.msra.mxu0 0.0
    %173 = vmatprep.subr.mxu0 0.0
    %174 = vmatpush1.msra.mxu0 0.0
    %175 = vmatprep.subr.mxu0 0.0
    %176 = vmatpush1.msra.mxu0 0.0
    %177 = vmatprep.subr.mxu0 0.0
    %178 = vmatpush1.msra.mxu0 0.0
    %179 = vmatprep.subr.mxu0 0.0
    %180 = vmatpush1.msra.mxu0 0.0
    %181 = vmatprep.subr.mxu0 0.0
    %182 = vmatpush1.msra.mxu0 0.0
    %183 = vmatprep.subr.mxu0 0.0
    %184 = vmatpush1.msra.mxu0 0.0
    %185 = vmatprep.subr.mxu0 0.0
    %186 = vmatpush1.msra.mxu0 0.0
    %187 = vmatprep.subr.mxu0 0.0
    %188 = vmatpush1.msra.mxu0 0.0
    %189 = vmatprep.subr.mxu0 0.0
    %190 = vmatpush1.msra.mxu0 0.0
    %191 = vmatprep.subr.mxu0 0.0
    %192 = vmatpush1.msra.mxu0 0.0
    %193 = vmatprep.mubr.f32.mxu0 0.0
    %194 = vmatmul.mubr.f32.gmra.mrb[0].mxu0 %v81
    %v195 = vpop.f32.mrb[0].mxu0
    %v196 = vadd.f32 0.0, %v195
    %v197 = vpop.f32.mrb[0].mxu0
    %198 = vmatprep.mubr.f32.mxu0 0.0
    %199 = vmatmul.mubr.f32.gmra.mrb[0].mxu0 %v82
    %v200 = vpop.f32.mrb[0].mxu0
    %v201 = vadd.f32 0.0, %v200
    %v202 = vpop.f32.mrb[0].mxu0
    %203 = vmatprep.mubr.f32.mxu0 0.0
    %204 = vmatmul.mubr.f32.gmra.mrb[0].mxu0 %v83
    %v205 = vpop.f32.mrb[0].mxu0
    %v206 = vadd.f32 0.0, %v205
    %v207 = vpop.f32.mrb[0].mxu0
    %208 = vmatprep.mubr.f32.mxu0 0.0
    %209 = vmatmul.mubr.f32.gmra.mrb[0].mxu0 %v84
    %v210 = vpop.f32.mrb[0].mxu0
    %v211 = vadd.f32 0.0, %v210
    %v212 = vpop.f32.mrb[0].mxu0
    %213 = vmatprep.mubr.f32.mxu0 0.0
    %214 = vmatmul.mubr.f32.gmra.mrb[0].mxu0 %v85
    %v215 = vpop.f32.mrb[0].mxu0
    %v216 = vadd.f32 0.0, %v215
    %v217 = vpop.f32.mrb[0].mxu0
    %218 = vmatprep.mubr.f32.mxu0 0.0
    %219 = vmatmul.mubr.f32.gmra.mrb[0].mxu0 %v86
    %v220 = vpop.f32.mrb[0].mxu0
    %v221 = vadd.f32 0.0, %v220
    %v222 = vpop.f32.mrb[0].mxu0
    %223 = vmatprep.mubr.f32.mxu0 0.0
    %224 = vmatmul.mubr.f32.gmra.mrb[0].mxu0 %v87
    %v225 = vpop.f32.mrb[0].mxu0
    %v226 = vadd.f32 0.0, %v225
    %v227 = vpop.f32.mrb[0].mxu0
    %228 = vmatprep.mubr.f32.mxu0 0.0
    %229 = vmatmul.mubr.f32.gmra.mrb[0].mxu0 %v88
    %v230 = vpop.f32.mrb[0].mxu0
    %v231 = vadd.f32 0.0, %v230
    %v232 = vpop.f32.mrb[0].mxu0
    %233 = vmatprep.mubr.f32.mxu0 0.0
    %234 = vmatmul.mubr.f32.gmra.mrb[0].mxu0 %v89
    %v235 = vpop.f32.mrb[0].mxu0
    %v236 = vadd.f32 0.0, %v235
    %v237 = vpop.f32.mrb[0].mxu0
    %238 = vmatprep.mubr.f32.mxu0 0.0
    %239 = vmatmul.mubr.f32.gmra.mrb[0].mxu0 %v90
    %v240 = vpop.f32.mrb[0].mxu0
    %v241 = vadd.f32 0.0, %v240
    %v242 = vpop.f32.mrb[0].mxu0
    %243 = vmatprep.mubr.f32.mxu0 0.0
    %244 = vmatmul.mubr.f32.gmra.mrb[0].mxu0 %v91
    %v245 = vpop.f32.mrb[0].mxu0
    %v246 = vadd.f32 0.0, %v245
    %v247 = vpop.f32.mrb[0].mxu0
    %248 = vmatprep.mubr.f32.mxu0 0.0
    %249 = vmatmul.mubr.f32.gmra.mrb[0].mxu0 %v92
    %v250 = vpop.f32.mrb[0].mxu0
    %v251 = vadd.f32 0.0, %v250
    %v252 = vpop.f32.mrb[0].mxu0
    %253 = vmatprep.mubr.f32.mxu0 0.0
    %254 = vmatmul.mubr.f32.gmra.mrb[0].mxu0 %v93
    %v255 = vpop.f32.mrb[0].mxu0
    %v256 = vadd.f32 0.0, %v255
    %v257 = vpop.f32.mrb[0].mxu0
    %258 = vmatprep.mubr.f32.mxu0 0.0
    %259 = vmatmul.mubr.f32.gmra.mrb[0].mxu0 %v94
    %v260 = vpop.f32.mrb[0].mxu0
    %v261 = vadd.f32 0.0, %v260
    %v262 = vpop.f32.mrb[0].mxu0
    %263 = vmatprep.mubr.f32.mxu0 0.0
    %264 = vmatmul.mubr.f32.gmra.mrb[0].mxu0 %v95
    %v265 = vpop.f32.mrb[0].mxu0
    %v266 = vadd.f32 0.0, %v265
    %v267 = vpop.f32.mrb[0].mxu0
    %268 = vmatprep.mubr.f32.mxu0 0.0
    %269 = vmatmul.mubr.f32.gmra.mrb[0].mxu0 %v96
    %v270 = vpop.f32.mrb[0].mxu0
    %v271 = vadd.f32 0.0, %v270
    %v272 = vpop.f32.mrb[0].mxu0
    %273 = vdwg.mxu0
    %v274 = vadd.f32 %v97, %v196
    %v275 = vadd.f32 %v98, %v201
    %v276 = vadd.f32 %v99, %v206
    %v277 = vadd.f32 %v100, %v211
    %v278 = vadd.f32 %v101, %v216
    %v279 = vadd.f32 %v102, %v221
    %v280 = vadd.f32 %v103, %v226
    %v281 = vadd.f32 %v104, %v231
    %v282 = vadd.f32 %v105, %v236
    %v283 = vadd.f32 %v106, %v241
    %v284 = vadd.f32 %v107, %v246
    %v285 = vadd.f32 %v108, %v251
    %v286 = vadd.f32 %v109, %v256
    %v287 = vadd.f32 %v110, %v261
    %v288 = vadd.f32 %v111, %v266
    %v289 = vadd.f32 %v112, %v271
    %290 = vst [vmem:[#allocation2] sm:$0xff] %v274
    %291 = vst [vmem:[#allocation2 + $0x8] sm:$0xff] %v275
    %292 = vst [vmem:[#allocation2 + $0x10] sm:$0xff] %v276
    %293 = vst [vmem:[#allocation2 + $0x18] sm:$0xff] %v277
    %294 = vst [vmem:[#allocation2 + $0x20] sm:$0xff] %v278
    %295 = vst [vmem:[#allocation2 + $0x28] sm:$0xff] %v279
    %296 = vst [vmem:[#allocation2 + $0x30] sm:$0xff] %v280
    %297 = vst [vmem:[#allocation2 + $0x38] sm:$0xff] %v281
    %298 = vst [vmem:[#allocation2 + $0x40] sm:$0xff] %v282
    %299 = vst [vmem:[#allocation2 + $0x48] sm:$0xff] %v283
    %300 = vst [vmem:[#allocation2 + $0x50] sm:$0xff] %v284
    %301 = vst [vmem:[#allocation2 + $0x58] sm:$0xff] %v285
    %302 = vst [vmem:[#allocation2 + $0x60] sm:$0xff] %v286
    %303 = vst [vmem:[#allocation2 + $0x68] sm:$0xff] %v287
    %304 = vst [vmem:[#allocation2 + $0x70] sm:$0xff] %v288
    %305 = vst [vmem:[#allocation2 + $0x78] sm:$0xff] %v289
    // Predicated region
    $region30: #{tpu_custom_call.1} parent=1 // pred_check
      %p306 = pneg %p54
    $region31: #{tpu_custom_call.1} parent=1 // pred_check_branch
      %308 = sbr.rel (%p306) target = $region33
    $region32: #{tpu_custom_call.1} parent=1 // pred_region
      %v309 = vld [vmem:[#allocation2] sm:$0xff]
      %v310 = vld [vmem:[#allocation2 + $0x8] sm:$0xff]
      %v311 = vld [vmem:[#allocation2 + $0x10] sm:$0xff]
      %v312 = vld [vmem:[#allocation2 + $0x18] sm:$0xff]
      %v313 = vld [vmem:[#allocation2 + $0x20] sm:$0xff]
      %v314 = vld [vmem:[#allocation2 + $0x28] sm:$0xff]
      %v315 = vld [vmem:[#allocation2 + $0x30] sm:$0xff]
      %v316 = vld [vmem:[#allocation2 + $0x38] sm:$0xff]
      %v317 = vld [vmem:[#allocation2 + $0x40] sm:$0xff]
      %v318 = vld [vmem:[#allocation2 + $0x48] sm:$0xff]
      %v319 = vld [vmem:[#allocation2 + $0x50] sm:$0xff]
      %v320 = vld [vmem:[#allocation2 + $0x58] sm:$0xff]
      %v321 = vld [vmem:[#allocation2 + $0x60] sm:$0xff]
      %v322 = vld [vmem:[#allocation2 + $0x68] sm:$0xff]
      %v323 = vld [vmem:[#allocation2 + $0x70] sm:$0xff]
      %v324 = vld [vmem:[#allocation2 + $0x78] sm:$0xff]
      %325 = vst [vmem:[#allocation9] sm:$0xff] %v309
      %326 = vst [vmem:[#allocation9 + $0x8] sm:$0xff] %v310
      %327 = vst [vmem:[#allocation9 + $0x10] sm:$0xff] %v311
      %328 = vst [vmem:[#allocation9 + $0x18] sm:$0xff] %v312
      %329 = vst [vmem:[#allocation9 + $0x20] sm:$0xff] %v313
      %330 = vst [vmem:[#allocation9 + $0x28] sm:$0xff] %v314
      %331 = vst [vmem:[#allocation9 + $0x30] sm:$0xff] %v315
      %332 = vst [vmem:[#allocation9 + $0x38] sm:$0xff] %v316
      %333 = vst [vmem:[#allocation9 + $0x40] sm:$0xff] %v317
      %334 = vst [vmem:[#allocation9 + $0x48] sm:$0xff] %v318
      %335 = vst [vmem:[#allocation9 + $0x50] sm:$0xff] %v319
      %336 = vst [vmem:[#allocation9 + $0x58] sm:$0xff] %v320
      %337 = vst [vmem:[#allocation9 + $0x60] sm:$0xff] %v321
      %338 = vst [vmem:[#allocation9 + $0x68] sm:$0xff] %v322
      %339 = vst [vmem:[#allocation9 + $0x70] sm:$0xff] %v323
      %340 = vst [vmem:[#allocation9 + $0x78] sm:$0xff] %v324
    $region33: #{tpu_custom_call.1} parent=1 // pred_fallthru
      _
    // Predicated region
    $region34: #{tpu_custom_call.1} parent=1 // pred_check
      _
    $region35: #{tpu_custom_call.1} parent=1 // pred_check_branch
      %342 = sbr.rel (0) target = $region37
    $region36: #{tpu_custom_call.1} parent=1 // pred_region
      %s344 = ssub.s32 2048, 2048
      %345 = vsyncadd [#allocation5], %s344
      %s346 = sshll.u32 [#allocation9], 4
      %s347 = int_to_ptr.vmem [resolvable:$true] %s346
      %352 = dma.vmem_to_hbm [thread:$0]  %s347, 2048, %s3, [#allocation5], 128, 128, 8
    $region37: #{tpu_custom_call.1} parent=1 // pred_fallthru
      _
    // Predicated region
    $region38: #{tpu_custom_call.1} parent=1 // pred_check
      _
    $region39: #{tpu_custom_call.1} parent=1 // pred_check_branch
      %354 = sbr.rel (0) target = $region41
    $region40: #{tpu_custom_call.1} parent=1 // pred_region
      %355 = dma.done [#allocation5], 2048
    $region41: #{tpu_custom_call.1} parent=1 // pred_fallthru
      _
    %356 = vsyncpa [#allocation4], 1
    %357 = vsyncpa [#allocation7], 1
    %358 = vsyncpa [#allocation5], 1

</llo_original>
